<compile_context>
chip_gen: v6e
topology: v6e:2x2x1
jax: 0.10.0
libtpu: 0.0.40
codegen_flags: <defaults>
</compile_context>

<pallas_src>
import jax
import jax.numpy as jnp
import numpy as np
from jax.experimental import pallas as pl
from jax.experimental.pallas import tpu as pltpu


_TARGET_TILE_BYTES = 4 * 1024 * 1024          # ~4 MiB per tile (mem-bound copy)
_VMEM_LIMIT_BYTES = 48 * 1024 * 1024          # headroom; safe on v5e/v6e/v7x
_SMALL_SINGLE_BLOCK_BYTES = 1 * 1024 * 1024   # awkward-but-small => one block
_LANE_CANDIDATES = (4096, 2048, 1024, 512, 256, 128)


def _identity_kernel(x_ref, o_ref):
    # Pure passthrough on the current VMEM tile.
    o_ref[...] = x_ref[...]


def _sublane_pack(itemsize: int) -> int:
    # Packed sublane tile per dtype width: f32 -> 8, bf16/f16 -> 16, int8/fp8 -> 32.
    return max(8, 32 // itemsize)


def _plan_tiles(total: int, itemsize: int):
    """Pick (rows, cols, tile_r) for a lane-dense, (pack, 128)-aligned copy.

    Returns None when `total` cannot be factored into rows (multiple of the
    packed sublane count) x cols (multiple of 128).
    """
    pack = _sublane_pack(itemsize)
    cols = None
    for cand in _LANE_CANDIDATES:                 # prefer the widest lane dim
        if total % (cand * pack) == 0:
            cols = cand
            break
    if cols is None:
        return None
    rows = total // cols                          # multiple of `pack` by construction

    # Largest multiple of `pack` dividing `rows` with tile bytes <= target.
    max_r = max(pack, (_TARGET_TILE_BYTES // (cols * itemsize)) // pack * pack)
    tile_r = pack
    k = min(rows, max_r) // pack
    while k >= 1:
        cand_r = k * pack
        if rows % cand_r == 0:
            tile_r = cand_r
            break
        k -= 1
    return rows, cols, tile_r


def _pallas_copy_2d(x2: jax.Array, tile_r: int) -> jax.Array:
    """In-place (aliased) tiled copy of a 2-D array; block = (tile_r, cols)."""
    rows, cols = x2.shape
    grid = (rows // tile_r,)
    return pl.pallas_call(
        _identity_kernel,
        out_shape=jax.ShapeDtypeStruct((rows, cols), x2.dtype),
        grid=grid,
        in_specs=[pl.BlockSpec((tile_r, cols), lambda i: (i, 0))],
        out_specs=pl.BlockSpec((tile_r, cols), lambda i: (i, 0)),
        input_output_aliases={0: 0},   # output reuses the input HBM buffer
        compiler_params=pltpu.CompilerParams(
            dimension_semantics=("parallel",),   # shards across 2 TCs on v7x
            vmem_limit_bytes=_VMEM_LIMIT_BYTES,
        ),
    )(x2)


def identity(x: jax.Array) -> jax.Array:
    """Pallas implementation of Identity.forward: returns x unchanged."""
    orig_shape = x.shape
    dtype = x.dtype
    total = int(x.size)
    if total == 0:
        return x  # empty array: nothing to copy
    itemsize = jnp.dtype(dtype).itemsize

    plan = _plan_tiles(total, itemsize)
    if plan is not None:
        rows, cols, tile_r = plan
        y2 = _pallas_copy_2d(x.reshape(rows, cols), tile_r)
        return y2.reshape(orig_shape)

    # Element count not a multiple of pack*128.
    if total * itemsize <= _SMALL_SINGLE_BLOCK_BYTES:
        # Small: single full-extent block (full dims are exempt from (8,128)).
        y2 = _pallas_copy_2d(x.reshape(1, total), 1)
        return y2.reshape(orig_shape)

    # Large + awkward: pad the flat view up to alignment, tiled copy, slice back.
    # TODO(synk): padding adds one extra HBM pass; a cdiv grid with a masked
    # edge block would avoid it.
    pack = _sublane_pack(itemsize)
    base = pack * 128
    padded = ((total + base - 1) // base) * base
    xf = jnp.pad(x.reshape(total), (0, padded - total))
    rows, cols, tile_r = _plan_tiles(padded, itemsize)
    y2 = _pallas_copy_2d(xf.reshape(rows, cols), tile_r)
    return y2.reshape(padded)[:total].reshape(orig_shape)


if __name__ == "__main__":
    key = jax.random.PRNGKey(0)
    # Small NCHW input consistent with typical use of Identity in conv models.
    x = jax.random.normal(key, (2, 4, 16, 16), dtype=jnp.float32)

    # Host-side reference copy taken BEFORE donation consumes x's buffer.
    x_host = np.asarray(x)

    # Donate the input so the aliased pallas output can reuse its HBM buffer.
    identity_jit = jax.jit(identity, donate_argnums=(0,))
    y = jax.block_until_ready(identity_jit(x))

    assert y.shape == x_host.shape
    assert y.dtype == x_host.dtype
    assert np.array_equal(np.asarray(y), x_host)

    print("KERNEL_OK")
</pallas_src>

<mosaic_0001>
module attributes {stable_mosaic.version = 11 : i64} {
  func.func @_identity_kernel(%arg0: i32, %arg1: memref<8x256xf32, #tpu.memory_space<vmem>>, %arg2: memref<8x256xf32, #tpu.memory_space<vmem>>) attributes {dimension_semantics = [#tpu.dimension_semantics<parallel>], iteration_bounds = array<i64: 1>, scalar_prefetch = 0 : i64, scratch_operands = 0 : i64, tpu.core_type = #tpu.core_type<tc>, window_params = [{transform_indices = @transform_0, window_bounds = array<i64: 8, 256>}, {transform_indices = @transform_1, window_bounds = array<i64: 8, 256>}]} {
    %c0 = arith.constant 0 : index
    %c0_0 = arith.constant 0 : index
    %0 = vector.load %arg1[%c0, %c0_0] : memref<8x256xf32, #tpu.memory_space<vmem>>, vector<8x256xf32>
    %c0_1 = arith.constant 0 : index
    %c0_2 = arith.constant 0 : index
    %1 = vector.load %arg2[%c0_1, %c0_2] : memref<8x256xf32, #tpu.memory_space<vmem>>, vector<8x256xf32>
    tpu.vector_store %arg2[%c0_1, %c0_2], %0 {strides = array<i32>} : memref<8x256xf32, #tpu.memory_space<vmem>>, vector<8x256xf32>,
    return
  }
  func.func @transform_0(%arg0: i32) -> (i32, i32) {
    %c0_i32 = arith.constant 0 : i32
    %c0_i32_0 = arith.constant 0 : i32
    return %arg0, %c0_i32 : i32, i32
  }
  func.func @transform_1(%arg0: i32) -> (i32, i32) {
    %c0_i32 = arith.constant 0 : i32
    %c0_i32_0 = arith.constant 0 : i32
    return %arg0, %c0_i32 : i32, i32
  }
}

</mosaic_0001>

<llo_original>
// kernel: identity.1
$region0: #{identity.1}
  #allocation0 [shape = 'u32[]', space=smem, size = 0x4, offset = 0x4, fixed_abs, tag = 'smem constant byte address 0x4 - core index']
  #allocation1 [shape = 'u32[144,128]{1,0:T(1,128)}', space=vmem, size = 0x12000, scoped, tag = 'internal scratch']
  %s0 = inlined_call_operand.vmem [shape: f32[8,256], index: 0, kind: input, shape index: {}, may-alias: {0,1}]
  %s1 = inlined_call_operand.vmem [shape: f32[8,256], index: 1, kind: output, shape index: {}, may-alias: {0,1}]
  %s2 = sld [smem:[#allocation0]]
  $region14: #{identity.1} parent=0
    _
  %s4 = ssub.s32 1, %s2
  %s5 = scalar_select 0, %s4, %s2
  // Predicated region
  $region2: #{identity.1} parent=0 // pred_check
    _
  $region3: #{identity.1} parent=0 // pred_check_branch
    %7 = sbr.rel (0) target = $region5
  $region4: #{identity.1} parent=0 // pred_region
    _
  $region5: #{identity.1} parent=0 // pred_fallthru
    _
  %v8 = vld [vmem:[%s0] sm:$0xff]
  %v9 = vld [vmem:[%s0 + $0x8] sm:$0xff]
  %10 = vst [vmem:[%s1] sm:$0xff] %v8
  %11 = vst [vmem:[%s1 + $0x8] sm:$0xff] %v9
  // Predicated region
  $region6: #{identity.1} parent=0 // pred_check
    _
  $region7: #{identity.1} parent=0 // pred_check_branch
    %13 = sbr.rel (0) target = $region9
  $region8: #{identity.1} parent=0 // pred_region
    _
  $region9: #{identity.1} parent=0 // pred_fallthru
    _
  // Predicated region
  $region10: #{identity.1} parent=0 // pred_check
    _
  $region11: #{identity.1} parent=0 // pred_check_branch
    %15 = sbr.rel (0) target = $region13
  $region12: #{identity.1} parent=0 // pred_region
    _
  $region13: #{identity.1} parent=0 // pred_fallthru
    _

</llo_original>
